<compile_context>
chip_gen: v7x
topology: tpu7x:2x2x1
jax: 0.10.0
libtpu: 0.0.40
codegen_flags: <defaults>
</compile_context>

<pallas_src>
import jax
import jax.numpy as jnp
from jax.experimental import pallas as pl
from jax.experimental.pallas import tpu as pltpu

# ---------------- problem sizes (small, synthetic) ----------------
B = 2              # number of examples
PTS_PER_EX = 64    # points per example (batch sorted, fixed count per example)
N = B * PTS_PER_EX
C_X = 4            # per-point feature channels
C_POS = 3
C_IN = C_X + C_POS # 7
H1 = 32            # MLP hidden
H2 = 64            # MLP output channels

# ---------------- padded / tiled sizes (lane-dense) ----------------
C_IN_PAD = 8       # 7 -> 8: clean last-dim for the first matmul operand
H1_PAD = 128       # lane-dense hidden (second matmul K and intermediate lanes)
H2_PAD = 128       # lane-dense output -> unmasked full-vreg stores
SUB = 8            # sublane rows in the per-example output slab (f32 min tile)
# Points per grid step along the reduction axis. In production use a large
# multiple of 256 (v6e/v7x) / 128 (v5e), sized against VMEM; kept small here so
# the demo exercises the multi-tile accumulation path (grid = (B, 2)).
TILE_PTS = 32
assert PTS_PER_EX % TILE_PTS == 0 and TILE_PTS % 8 == 0


def global_sa_kernel(xcat_ref, w1_ref, b1_ref, w2_ref, b2_ref, out_ref):
    # out_ref is the resident per-example accumulator across the point-tile axis.
    @pl.when(pl.program_id(1) == 0)
    def _():
        out_ref[...] = jnp.full_like(out_ref, -jnp.inf)

    x = xcat_ref[0]                                       # [TILE_PTS, C_IN_PAD] bf16
    # shared per-point MLP: (Linear + ReLU) x2 — bf16 MXU inputs, f32 accumulate,
    # elementwise in f32 (v5e has no bf16 VPU path).
    h = jnp.dot(x, w1_ref[...], preferred_element_type=jnp.float32) + b1_ref[...]
    h = jnp.maximum(h, 0.0)                               # f32 [TILE_PTS, H1_PAD]
    h = jnp.dot(h.astype(jnp.bfloat16), w2_ref[...],
                preferred_element_type=jnp.float32) + b2_ref[...]
    h = jnp.maximum(h, 0.0)                               # f32 [TILE_PTS, H2_PAD]

    # running max over this tile's points, folded straight into the accumulator.
    tile_max = jnp.max(h, axis=0, keepdims=True)          # [1, H2_PAD]
    out_ref[...] = jnp.maximum(out_ref[...], tile_max[None])  # bcast -> (1, SUB, H2_PAD)


def global_sa_module(x, pos, batch, w1, b1, w2, b2):
    """x: [N, C_X] f32, pos: [N, C_POS] f32, batch: [N] int32.

    Assumes `batch` is sorted with exactly PTS_PER_EX points per example (as in
    the demo below), so points reshape to [B, PTS_PER_EX, C].
    """
    # TODO(synk): ragged / unsorted `batch` (general global_max_pool) needs
    # scalar-prefetched segment offsets instead of the fixed reshape below.
    xcat = jnp.concatenate([x, pos], axis=1).astype(jnp.float32)      # [N, 7]
    xcat = jnp.pad(xcat, ((0, 0), (0, C_IN_PAD - C_IN)))              # [N, 8]
    xcat = xcat.reshape(B, PTS_PER_EX, C_IN_PAD).astype(jnp.bfloat16)

    # Zero-padded, lane-dense parameters. Padded columns/rows contribute exactly
    # 0 and ReLU(0) = 0, so padded output channels are 0 and sliced off below.
    w1p = jnp.zeros((C_IN_PAD, H1_PAD), jnp.float32).at[:C_IN, :H1].set(w1)
    b1p = jnp.zeros((1, H1_PAD), jnp.float32).at[:, :H1].set(b1)
    w2p = jnp.zeros((H1_PAD, H2_PAD), jnp.float32).at[:H1, :H2].set(w2)
    b2p = jnp.zeros((1, H2_PAD), jnp.float32).at[:, :H2].set(b2)
    w1p = w1p.astype(jnp.bfloat16)
    w2p = w2p.astype(jnp.bfloat16)

    grid = (B, PTS_PER_EX // TILE_PTS)
    out = pl.pallas_call(
        global_sa_kernel,
        out_shape=jax.ShapeDtypeStruct((B, SUB, H2_PAD), jnp.float32),
        grid_spec=pltpu.PrefetchScalarGridSpec(
            num_scalar_prefetch=0,
            grid=grid,
            in_specs=[
                pl.BlockSpec((1, TILE_PTS, C_IN_PAD), lambda b, t: (b, t, 0)),  # points
                pl.BlockSpec((C_IN_PAD, H1_PAD),      lambda b, t: (0, 0)),     # W1
                pl.BlockSpec((1, H1_PAD),             lambda b, t: (0, 0)),     # b1
                pl.BlockSpec((H1_PAD, H2_PAD),        lambda b, t: (0, 0)),     # W2
                pl.BlockSpec((1, H2_PAD),             lambda b, t: (0, 0)),     # b2
            ],
            # per-example resident accumulator slab (lane-dense last dim)
            out_specs=pl.BlockSpec((1, SUB, H2_PAD), lambda b, t: (b, 0, 0)),
        ),
        compiler_params=pltpu.CompilerParams(
            dimension_semantics=("parallel", "arbitrary")),
    )(xcat, w1p, b1p, w2p, b2p)

    x_out = out[:, 0, :H2]                                # [B, H2]
    pos_out = jnp.zeros((B, C_POS), dtype=pos.dtype)
    batch_out = jnp.arange(B, dtype=batch.dtype)
    return x_out, pos_out, batch_out


def _reference(x, pos, batch, w1, b1, w2, b2):
    xcat = jnp.concatenate([x, pos], axis=1)
    h = jnp.maximum(xcat @ w1 + b1, 0.0)
    h = jnp.maximum(h @ w2 + b2, 0.0)
    outs = []
    for bb in range(B):
        m = jnp.where((batch == bb)[:, None], h, -jnp.inf)
        outs.append(jnp.max(m, axis=0))
    return jnp.stack(outs, axis=0)


if __name__ == "__main__":
    key = jax.random.PRNGKey(0)
    k1, k2, k3, k4, k5, k6 = jax.random.split(key, 6)

    # deterministic synthetic parameters (MLP([C_IN, H1, H2]))
    w1 = jax.random.normal(k1, (C_IN, H1), jnp.float32) * 0.2
    b1 = jax.random.normal(k2, (1, H1), jnp.float32) * 0.05
    w2 = jax.random.normal(k3, (H1, H2), jnp.float32) * 0.2
    b2 = jax.random.normal(k4, (1, H2), jnp.float32) * 0.05

    # deterministic inputs
    x = jax.random.normal(k5, (N, C_X), jnp.float32)
    pos = jax.random.normal(k6, (N, C_POS), jnp.float32)
    batch = jnp.repeat(jnp.arange(B, dtype=jnp.int32), PTS_PER_EX)

    x_out, pos_out, batch_out = global_sa_module(x, pos, batch, w1, b1, w2, b2)
    jax.block_until_ready((x_out, pos_out, batch_out))

    ref = _reference(x, pos, batch, w1, b1, w2, b2)   # f32 reference
    assert x_out.shape == (B, H2) and pos_out.shape == (B, C_POS) and batch_out.shape == (B,)
    # tolerance accounts for bf16 matmul inputs (f32 accumulation)
    assert jnp.allclose(x_out, ref, atol=2e-2, rtol=2e-2), \
        float(jnp.max(jnp.abs(x_out - ref)))
    assert jnp.all(pos_out == 0.0) and jnp.all(batch_out == jnp.arange(B))
    print("KERNEL_OK")
</pallas_src>

<mosaic_0001>
module attributes {stable_mosaic.version = 11 : i64} {
  func.func @global_sa_kernel(%arg0: i32, %arg1: i32, %arg2: memref<1x32x8xbf16, #tpu.memory_space<vmem>>, %arg3: memref<8x128xbf16, #tpu.memory_space<vmem>>, %arg4: memref<1x128xf32, #tpu.memory_space<vmem>>, %arg5: memref<128x128xbf16, #tpu.memory_space<vmem>>, %arg6: memref<1x128xf32, #tpu.memory_space<vmem>>, %arg7: memref<1x8x128xf32, #tpu.memory_space<vmem>>) attributes {dimension_semantics = [#tpu.dimension_semantics<parallel>, #tpu.dimension_semantics<arbitrary>], iteration_bounds = array<i64: 2, 2>, scalar_prefetch = 0 : i64, scratch_operands = 0 : i64, tpu.core_type = #tpu.core_type<tc>, window_params = [{transform_indices = @transform_0, window_bounds = array<i64: 1, 32, 8>}, {pipeline_mode = #tpu.pipeline_mode<synchronous>, transform_indices = @transform_1, window_bounds = array<i64: 8, 128>}, {pipeline_mode = #tpu.pipeline_mode<synchronous>, transform_indices = @transform_2, window_bounds = array<i64: 1, 128>}, {pipeline_mode = #tpu.pipeline_mode<synchronous>, transform_indices = @transform_3, window_bounds = array<i64: 128, 128>}, {pipeline_mode = #tpu.pipeline_mode<synchronous>, transform_indices = @transform_4, window_bounds = array<i64: 1, 128>}, {transform_indices = @transform_5, window_bounds = array<i64: 1, 8, 128>}]} {
    %c0_i32 = arith.constant 0 : i32
    %0 = arith.cmpi eq, %arg1, %c0_i32 : i32
    %1 = arith.extui %0 : i1 to i32
    %c0_i32_0 = arith.constant 0 : i32
    %2 = arith.cmpi ne, %1, %c0_i32_0 : i32
    scf.if %2 {
      %cst_21 = arith.constant 0xFF800000 : f32
      %27 = vector.broadcast %cst_21 : f32 to vector<1x8x128xf32>
      %c0_22 = arith.constant 0 : index
      %c0_23 = arith.constant 0 : index
      %c0_24 = arith.constant 0 : index
      %28 = vector.load %arg7[%c0_22, %c0_23, %c0_24] : memref<1x8x128xf32, #tpu.memory_space<vmem>>, vector<1x8x128xf32>
      tpu.vector_store %arg7[%c0_22, %c0_23, %c0_24], %27 {strides = array<i32>} : memref<1x8x128xf32, #tpu.memory_space<vmem>>, vector<1x8x128xf32>,
    } else {
    }
    %c0 = arith.constant 0 : index
    %c0_1 = arith.constant 0 : index
    %c0_2 = arith.constant 0 : index
    %3 = vector.load %arg2[%c0, %c0_1, %c0_2] : memref<1x32x8xbf16, #tpu.memory_space<vmem>>, vector<1x32x8xbf16>
    %4 = vector.shape_cast %3 : vector<1x32x8xbf16> to vector<32x8xbf16>
    %c0_3 = arith.constant 0 : index
    %c0_4 = arith.constant 0 : index
    %5 = vector.load %arg3[%c0_3, %c0_4] : memref<8x128xbf16, #tpu.memory_space<vmem>>, vector<8x128xbf16>
    %cst = arith.constant dense<0.000000e+00> : vector<32x128xf32>
    %6 = tpu.matmul %4, %5, %cst {dimension_numbers = #tpu.dot_dimension_numbers<[1], [0], [0], [1], [0, 0, 1, 1], [], []>} : vector<32x8xbf16>, vector<8x128xbf16>, vector<32x128xf32> -> vector<32x128xf32>
    %c0_5 = arith.constant 0 : index
    %c0_6 = arith.constant 0 : index
    %7 = vector.load %arg4[%c0_5, %c0_6] : memref<1x128xf32, #tpu.memory_space<vmem>>, vector<1x128xf32>
    %8 = vector.broadcast %7 : vector<1x128xf32> to vector<32x128xf32>
    %9 = arith.addf %6, %8 : vector<32x128xf32>
    %cst_7 = arith.constant 0.000000e+00 : f32
    %10 = vector.broadcast %cst_7 : f32 to vector<32x128xf32>
    %11 = arith.maximumf %9, %10 : vector<32x128xf32>
    %12 = arith.truncf %11 : vector<32x128xf32> to vector<32x128xbf16>
    %c0_8 = arith.constant 0 : index
    %c0_9 = arith.constant 0 : index
    %13 = vector.load %arg5[%c0_8, %c0_9] : memref<128x128xbf16, #tpu.memory_space<vmem>>, vector<128x128xbf16>
    %cst_10 = arith.constant dense<0.000000e+00> : vector<32x128xf32>
    %14 = tpu.matmul %12, %13, %cst_10 {dimension_numbers = #tpu.dot_dimension_numbers<[1], [0], [0], [1], [0, 0, 1, 1], [], []>} : vector<32x128xbf16>, vector<128x128xbf16>, vector<32x128xf32> -> vector<32x128xf32>
    %c0_11 = arith.constant 0 : index
    %c0_12 = arith.constant 0 : index
    %15 = vector.load %arg6[%c0_11, %c0_12] : memref<1x128xf32, #tpu.memory_space<vmem>>, vector<1x128xf32>
    %16 = vector.broadcast %15 : vector<1x128xf32> to vector<32x128xf32>
    %17 = arith.addf %14, %16 : vector<32x128xf32>
    %cst_13 = arith.constant 0.000000e+00 : f32
    %18 = vector.broadcast %cst_13 : f32 to vector<32x128xf32>
    %19 = arith.maximumf %17, %18 : vector<32x128xf32>
    %cst_14 = arith.constant dense<0xFF800000> : vector<128xf32>
    %20 = vector.multi_reduction <maximumf>, %19, %cst_14 [0] : vector<32x128xf32> to vector<128xf32>
    %21 = vector.shape_cast %20 : vector<128xf32> to vector<1x128xf32>
    %c0_15 = arith.constant 0 : index
    %c0_16 = arith.constant 0 : index
    %c0_17 = arith.constant 0 : index
    %22 = vector.load %arg7[%c0_15, %c0_16, %c0_17] : memref<1x8x128xf32, #tpu.memory_space<vmem>>, vector<1x8x128xf32>
    %23 = vector.shape_cast %21 : vector<1x128xf32> to vector<1x1x128xf32>
    %24 = vector.broadcast %23 : vector<1x1x128xf32> to vector<1x8x128xf32>
    %25 = arith.maximumf %22, %24 : vector<1x8x128xf32>
    %c0_18 = arith.constant 0 : index
    %c0_19 = arith.constant 0 : index
    %c0_20 = arith.constant 0 : index
    %26 = vector.load %arg7[%c0_18, %c0_19, %c0_20] : memref<1x8x128xf32, #tpu.memory_space<vmem>>, vector<1x8x128xf32>
    tpu.vector_store %arg7[%c0_18, %c0_19, %c0_20], %25 {strides = array<i32>} : memref<1x8x128xf32, #tpu.memory_space<vmem>>, vector<1x8x128xf32>,
    return
  }
  func.func @transform_0(%arg0: i32, %arg1: i32) -> (i32, i32, i32) {
    %c0_i32 = arith.constant 0 : i32
    %c0_i32_0 = arith.constant 0 : i32
    return %arg0, %arg1, %c0_i32 : i32, i32, i32
  }
  func.func @transform_1(%arg0: i32, %arg1: i32) -> (i32, i32) {
    %c0_i32 = arith.constant 0 : i32
    %c0_i32_0 = arith.constant 0 : i32
    %c0_i32_1 = arith.constant 0 : i32
    return %c0_i32, %c0_i32_0 : i32, i32
  }
  func.func @transform_2(%arg0: i32, %arg1: i32) -> (i32, i32) {
    %c0_i32 = arith.constant 0 : i32
    %c0_i32_0 = arith.constant 0 : i32
    %c0_i32_1 = arith.constant 0 : i32
    return %c0_i32, %c0_i32_0 : i32, i32
  }
  func.func @transform_3(%arg0: i32, %arg1: i32) -> (i32, i32) {
    %c0_i32 = arith.constant 0 : i32
    %c0_i32_0 = arith.constant 0 : i32
    %c0_i32_1 = arith.constant 0 : i32
    return %c0_i32, %c0_i32_0 : i32, i32
  }
  func.func @transform_4(%arg0: i32, %arg1: i32) -> (i32, i32) {
    %c0_i32 = arith.constant 0 : i32
    %c0_i32_0 = arith.constant 0 : i32
    %c0_i32_1 = arith.constant 0 : i32
    return %c0_i32, %c0_i32_0 : i32, i32
  }
  func.func @transform_5(%arg0: i32, %arg1: i32) -> (i32, i32, i32) {
    %c0_i32 = arith.constant 0 : i32
    %c0_i32_0 = arith.constant 0 : i32
    %c0_i32_1 = arith.constant 0 : i32
    return %arg0, %c0_i32, %c0_i32_0 : i32, i32, i32
  }
}

</mosaic_0001>

<llo_original>
// kernel: tpu_custom_call.1
$region0: #{tpu_custom_call.1}
  #allocation0 [shape = 'u32[]', space=smem, size = 0x4, offset = 0x4, fixed_abs, tag = 'smem constant byte address 0x4 - core index']
  #allocation1 [shape = 'u32[144,128]{1,0:T(1,128)}', space=vmem, size = 0x12000, scoped, tag = 'internal scratch']
  %s0 = inlined_call_operand.vmem [shape: bf16[2,64,8], index: 0, kind: input, shape index: {}]
  %s1 = inlined_call_operand.vmem [shape: bf16[8,128], index: 1, kind: input, shape index: {}]
  %s2 = inlined_call_operand.vmem [shape: f32[1,128], index: 2, kind: input, shape index: {}]
  %s3 = inlined_call_operand.vmem [shape: bf16[128,128], index: 3, kind: input, shape index: {}]
  %s4 = inlined_call_operand.vmem [shape: f32[1,128], index: 4, kind: input, shape index: {}]
  %s5 = inlined_call_operand.hbm [shape: f32[2,8,128], index: 5, kind: output, shape index: {}]
  %s6 = sld [smem:[#allocation0]]
  $region57: #{tpu_custom_call.1} parent=0
    _
  %s8 = ssub.s32 1, %s6
  %s9 = scalar_select 0, %s8, %s6
  $region1: #{tpu_custom_call.1} parent=0
    #allocation2 [shape = 'u8[8192]{0}', space=vmem, size = 0x2000, scoped, tag = 'output window, operand 0']
    #allocation3 [shape = 's32[2]{0}', space=sflag, size = 0x8, scoped, tag = 'scoped memory for tpu_custom_call.1']
    %10 = vsyncpa [#allocation3], 0
    %s11 = scalar_lea.sflag [#allocation3], 1
    %12 = vsyncpa %s11, 0
    loop: start=0, step=1, limit=6
    $region2: #{tpu_custom_call.1} parent=1 // loop_pre_header
      _
    $region3: #{tpu_custom_call.1} parent=1 // loop_header
      %s14 = sphi 0, %s18
      %p15 = scmp.ge.s32.totalorder %s14, 6
      %s21 = sphi 0, %s33
      %s22 = sphi 0, %s29
      %s23 = sphi 0, %s21
      %s24 = sphi 0, %s22
      %s25 = sphi 0, %s23
      %s26 = sphi 0, %s24
      %s38 = sphi 0, %s40
      %s41 = sphi 0, %s38
      %s42 = sphi 0, %s41
      %s58 = sphi 0, %s42
      %s62 = sphi 0, %s62
      %s64 = sphi 0, %s62
      %s65 = sphi 0, %s64
      %s79 = sphi 0, %s65
      %s83 = sphi 0, %s83
      %s85 = sphi 0, %s83
      %s86 = sphi 0, %s85
      %s100 = sphi 0, %s86
      %s104 = sphi 0, %s104
      %s106 = sphi 0, %s104
      %s107 = sphi 0, %s106
      %s121 = sphi 0, %s107
      %s125 = sphi 0, %s125
      %s127 = sphi 0, %s125
      %s128 = sphi 0, %s127
      %s142 = sphi 0, %s128
      %s148 = sphi 0, %s150
      %s151 = sphi 0, %s148
      %s152 = sphi 0, %s151
      %s168 = sphi 0, %s152
    $region4: #{tpu_custom_call.1} parent=1 // loop_header_branch
      %17 = sbr.rel (%p15) target = $region8
    $region5: #{tpu_custom_call.1} parent=1 // loop_body
      %s19 = ssub.s32 %s14, 1
      %s20 = ssub.s32 %s14, 2
      %s27 = sadd.s32 1, %s22
      %p28 = scmp.ge.s32.totalorder %s27, 2
      %s29 = scalar_select %p28, 0, %s27
      %s30 = sadd.s32 1, %s21
      %s31 = scalar_select %p28, %s30, %s21
      %p32 = scmp.ge.s32.totalorder %s31, 2
      %s33 = scalar_select %p32, 0, %s31
      %s34 = ssub.s32 %s21, %s33
      %s35 = ssub.s32 %s22, %s29
      %s36 = sor.u32 %s34, %s35
      %p37 = scmp.eq.s32.totalorder %s36, 0
      %s39 = sadd.s32 %s38, 1
      %s40 = scalar_select %p37, %s38, %s39
      %p43 = pneg %p37
      %p44 = scmp.eq.s32.totalorder %s14, 3
      %p45 = por %p43, %p44
      %p46 = scmp.ne.s32.totalorder %s38, %s41
      %p47 = scmp.eq.s32.totalorder %s14, 0
      %p48 = por %p46, %p47
      %p49 = scmp.ne.s32.totalorder %s38, %s41
      %p50 = scmp.eq.s32.totalorder %s19, 3
      %p51 = por %p49, %p50
      %p52 = scmp.ne.s32.totalorder %s41, %s42
      %p53 = scmp.eq.s32.totalorder %s19, 0
      %p54 = por %p52, %p53
      %p55 = scmp.ne.s32.totalorder %s41, %s42
      %p56 = scmp.eq.s32.totalorder %s20, 3
      %p57 = por %p55, %p56
      %p59 = scmp.ne.s32.totalorder %s42, %s58
      %p60 = scmp.eq.s32.totalorder %s20, 0
      %p61 = por %p59, %p60
      %s63 = sadd.s32 %s62, 1
      %p66 = scmp.eq.s32.totalorder %s14, 3
      %p67 = scmp.ne.s32.totalorder %s62, %s64
      %p68 = scmp.eq.s32.totalorder %s14, 0
      %p69 = por %p67, %p68
      %p70 = scmp.ne.s32.totalorder %s62, %s64
      %p71 = scmp.eq.s32.totalorder %s19, 3
      %p72 = por %p70, %p71
      %p73 = scmp.ne.s32.totalorder %s64, %s65
      %p74 = scmp.eq.s32.totalorder %s19, 0
      %p75 = por %p73, %p74
      %p76 = scmp.ne.s32.totalorder %s64, %s65
      %p77 = scmp.eq.s32.totalorder %s20, 3
      %p78 = por %p76, %p77
      %p80 = scmp.ne.s32.totalorder %s65, %s79
      %p81 = scmp.eq.s32.totalorder %s20, 0
      %p82 = por %p80, %p81
      %s84 = sadd.s32 %s83, 1
      %p87 = scmp.eq.s32.totalorder %s14, 3
      %p88 = scmp.ne.s32.totalorder %s83, %s85
      %p89 = scmp.eq.s32.totalorder %s14, 0
      %p90 = por %p88, %p89
      %p91 = scmp.ne.s32.totalorder %s83, %s85
      %p92 = scmp.eq.s32.totalorder %s19, 3
      %p93 = por %p91, %p92
      %p94 = scmp.ne.s32.totalorder %s85, %s86
      %p95 = scmp.eq.s32.totalorder %s19, 0
      %p96 = por %p94, %p95
      %p97 = scmp.ne.s32.totalorder %s85, %s86
      %p98 = scmp.eq.s32.totalorder %s20, 3
      %p99 = por %p97, %p98
      %p101 = scmp.ne.s32.totalorder %s86, %s100
      %p102 = scmp.eq.s32.totalorder %s20, 0
      %p103 = por %p101, %p102
      %s105 = sadd.s32 %s104, 1
      %p108 = scmp.eq.s32.totalorder %s14, 3
      %p109 = scmp.ne.s32.totalorder %s104, %s106
      %p110 = scmp.eq.s32.totalorder %s14, 0
      %p111 = por %p109, %p110
      %p112 = scmp.ne.s32.totalorder %s104, %s106
      %p113 = scmp.eq.s32.totalorder %s19, 3
      %p114 = por %p112, %p113
      %p115 = scmp.ne.s32.totalorder %s106, %s107
      %p116 = scmp.eq.s32.totalorder %s19, 0
      %p117 = por %p115, %p116
      %p118 = scmp.ne.s32.totalorder %s106, %s107
      %p119 = scmp.eq.s32.totalorder %s20, 3
      %p120 = por %p118, %p119
      %p122 = scmp.ne.s32.totalorder %s107, %s121
      %p123 = scmp.eq.s32.totalorder %s20, 0
      %p124 = por %p122, %p123
      %s126 = sadd.s32 %s125, 1
      %p129 = scmp.eq.s32.totalorder %s14, 3
      %p130 = scmp.ne.s32.totalorder %s125, %s127
      %p131 = scmp.eq.s32.totalorder %s14, 0
      %p132 = por %p130, %p131
      %p133 = scmp.ne.s32.totalorder %s125, %s127
      %p134 = scmp.eq.s32.totalorder %s19, 3
      %p135 = por %p133, %p134
      %p136 = scmp.ne.s32.totalorder %s127, %s128
      %p137 = scmp.eq.s32.totalorder %s19, 0
      %p138 = por %p136, %p137
      %p139 = scmp.ne.s32.totalorder %s127, %s128
      %p140 = scmp.eq.s32.totalorder %s20, 3
      %p141 = por %p139, %p140
      %p143 = scmp.ne.s32.totalorder %s128, %s142
      %p144 = scmp.eq.s32.totalorder %s20, 0
      %p145 = por %p143, %p144
      %s146 = ssub.s32 %s21, %s33
      %p147 = scmp.eq.s32.totalorder %s146, 0
      %s149 = sadd.s32 %s148, 1
      %s150 = scalar_select %p147, %s148, %s149
      %p153 = pneg %p147
      %p154 = scmp.eq.s32.totalorder %s14, 3
      %p155 = por %p153, %p154
      %p156 = scmp.ne.s32.totalorder %s148, %s151
      %p157 = scmp.eq.s32.totalorder %s14, 0
      %p158 = por %p156, %p157
      %p159 = scmp.ne.s32.totalorder %s148, %s151
      %p160 = scmp.eq.s32.totalorder %s19, 3
      %p161 = por %p159, %p160
      %p162 = scmp.ne.s32.totalorder %s151, %s152
      %p163 = scmp.eq.s32.totalorder %s19, 0
      %p164 = por %p162, %p163
      %p165 = scmp.ne.s32.totalorder %s151, %s152
      %p166 = scmp.eq.s32.totalorder %s20, 3
      %p167 = por %p165, %p166
      %p169 = scmp.ne.s32.totalorder %s152, %s168
      %p170 = scmp.eq.s32.totalorder %s20, 0
      %p171 = por %p169, %p170
      %p172 = scmp.le.s32.totalorder 1, %s14
      %p173 = scmp.lt.s32.totalorder %s14, 5
      %p174 = pnand %p172, %p173
      %p175 = pneg %p174
      // Predicated region
      $region9: #{tpu_custom_call.1} parent=5 // pred_check
        _
      $region10: #{tpu_custom_call.1} parent=5 // pred_check_branch
        %177 = sbr.rel (%p174) target = $region12
      $region11: #{tpu_custom_call.1} parent=5 // pred_region
        %s178 = ssub.s32 %s14, 1
        // Predicated region
        $region13: #{tpu_custom_call.1} parent=11 // pred_check
          %p179 = pneg %p75
        $region14: #{tpu_custom_call.1} parent=11 // pred_check_branch
          %181 = sbr.rel (%p179) target = $region16
        $region15: #{tpu_custom_call.1} parent=11 // pred_region
          _
        $region16: #{tpu_custom_call.1} parent=11 // pred_fallthru
          _
        // Predicated region
        $region17: #{tpu_custom_call.1} parent=11 // pred_check
          %p182 = pneg %p96
        $region18: #{tpu_custom_call.1} parent=11 // pred_check_branch
          %184 = sbr.rel (%p182) target = $region20
        $region19: #{tpu_custom_call.1} parent=11 // pred_region
          _
        $region20: #{tpu_custom_call.1} parent=11 // pred_fallthru
          _
        // Predicated region
        $region21: #{tpu_custom_call.1} parent=11 // pred_check
          %p185 = pneg %p117
        $region22: #{tpu_custom_call.1} parent=11 // pred_check_branch
          %187 = sbr.rel (%p185) target = $region24
        $region23: #{tpu_custom_call.1} parent=11 // pred_region
          _
        $region24: #{tpu_custom_call.1} parent=11 // pred_fallthru
          _
        // Predicated region
        $region25: #{tpu_custom_call.1} parent=11 // pred_check
          %p188 = pneg %p138
        $region26: #{tpu_custom_call.1} parent=11 // pred_check_branch
          %190 = sbr.rel (%p188) target = $region28
        $region27: #{tpu_custom_call.1} parent=11 // pred_region
          _
        $region28: #{tpu_custom_call.1} parent=11 // pred_fallthru
          _
      $region12: #{tpu_custom_call.1} parent=5 // pred_fallthru
        _
      %p191 = scmp.lt.s32.totalorder %s14, 4
      // Predicated region
      $region29: #{tpu_custom_call.1} parent=5 // pred_check
        %p192 = pneg %p191
      $region30: #{tpu_custom_call.1} parent=5 // pred_check_branch
        %194 = sbr.rel (%p192) target = $region32
      $region31: #{tpu_custom_call.1} parent=5 // pred_region
        // Predicated region
        $region33: #{tpu_custom_call.1} parent=31 // pred_check
          %p195 = pneg %p48
        $region34: #{tpu_custom_call.1} parent=31 // pred_check_branch
          %197 = sbr.rel (%p195) target = $region36
        $region35: #{tpu_custom_call.1} parent=31 // pred_region
          %s198 = smul.u32 4, %s22
          %p199 = scmp.lt.s32.totalorder %s21, 1
          %s200 = scalar_select %p199, %s21, 1
          %p201 = scmp.lt.s32.totalorder %s198, 7
          %s202 = scalar_select %p201, %s198, 7
          %s203 = smul.addr %s200, 8
          %s204 = sadd.s32 %s202, %s203
          %s205 = smul.addr %s204, 4
          %s206 = scalar_lea.vmem %s0, %s205
          %s207 = smul.u32 4, %s22
        $region36: #{tpu_custom_call.1} parent=31 // pred_fallthru
          _
      $region32: #{tpu_custom_call.1} parent=5 // pred_fallthru
        _
      %p208 = scmp.le.s32.totalorder 1, %s14
      %p209 = scmp.lt.s32.totalorder %s14, 5
      %p210 = pnand %p208, %p209
      %p211 = pneg %p210
      // Predicated region
      $region37: #{tpu_custom_call.1} parent=5 // pred_check
        _
      $region38: #{tpu_custom_call.1} parent=5 // pred_check_branch
        %213 = sbr.rel (%p210) target = $region40
      $region39: #{tpu_custom_call.1} parent=5 // pred_region
        %s214 = ssub.s32 %s14, 1
        %s215 = smul.u32 4, %s24
        %p216 = scmp.lt.s32.totalorder %s23, 1
        %s217 = scalar_select %p216, %s23, 1
        %p218 = scmp.lt.s32.totalorder %s215, 7
        %s219 = scalar_select %p218, %s215, 7
        %s220 = smul.addr %s217, 8
        %s221 = sadd.s32 %s219, %s220
        %s222 = smul.addr %s221, 4
        %s223 = scalar_lea.vmem %s0, %s222
        %p224 = pneg %p54
        %p225 = pneg %p51
        %p226 = pneg %p75
        %p227 = pneg %p72
        %p228 = pneg %p96
        %p229 = pneg %p93
        %p230 = pneg %p117
        %p231 = pneg %p114
        %p232 = pneg %p138
        %p233 = pneg %p135
        %p234 = pneg %p164
        %p235 = pneg %p161
        %s236 = sand.u32 %s151, 1
        %s237 = scalar_lea.sflag [#allocation3], %s236
        %s238 = sand.u32 %s151, 1
        %s239 = smul.addr %s238, 8
        %s240 = scalar_lea.vmem [#allocation2], %s239
        %s241 = smul.u32 4, %s24
        %p242 = scmp.lt.s32.totalorder %s23, 1
        %s243 = scalar_select %p242, %s23, 1
        %p244 = scmp.lt.s32.totalorder %s241, 7
        %s245 = scalar_select %p244, %s241, 7
        %s246 = smul.addr %s243, 8
        %s247 = sadd.s32 %s245, %s246
        %s248 = smul.addr %s247, 4
        %s249 = scalar_lea.vmem %s0, %s248
        %s250 = smul.u32 4, %s24
        %p252 = scmp.eq.s32.totalorder %s24, 0
        // Predicated region
        $region41: #{tpu_custom_call.1} parent=39 // pred_check
          %p253 = pneg %p252
        $region42: #{tpu_custom_call.1} parent=39 // pred_check_branch
          %255 = sbr.rel (%p253) target = $region44
        $region43: #{tpu_custom_call.1} parent=39 // pred_region
          %256 = vst [vmem:[%s240] sm:$0xff] -inf
        $region44: #{tpu_custom_call.1} parent=39 // pred_fallthru
          _
        %v257 = vld [vmem:[%s249] sm:$0xf]
        %v258 = vld [vmem:[%s249 + $0x4] sm:$0xf]
        %v259 = vld [vmem:[%s249 + $0x8] sm:$0xf]
        %v260 = vld [vmem:[%s249 + $0xc] sm:$0xf]
        %v261 = vld [vmem:[%s1] sm:$0xf]
        %v262 = vld [vmem:[%s2] sm:$0x1]
        %v264 = vlaneseq
        %v265 = vshrl.u32 %v264, 7
        %v266 = vsub.s32 0, %v265
        %v267 = vrot.slane %v262, %v266
        %v273 = vunpack.c.l.b16 %v257
        %v274 = vunpack.c.l.b16 %v258
        %v275 = vunpack.c.l.b16 %v259
        %v276 = vunpack.c.l.b16 %v260
        %v277 = vpack.c.b16 %v274, %v273
        %v278 = vpack.c.b16 %v276, %v275
        %vm279 = vcmask 64512
        %v281 = vsel %vm279, %v277, 0
        %v284 = vsel %vm279, %v278, 0
        %vm286 = vcmask 1043456
        %v288 = vsel %vm286, %v261, 0
        %290 = vmatprep.subr.bf16.mxu0 0
        %291 = vmatpush1.bf16.msra.mxu0 %v288
        %292 = vmatprep.subr.bf16.mxu0 0
        %293 = vmatpush1.bf16.msra.mxu0 0
        %294 = vmatprep.subr.bf16.mxu0 0
        %295 = vmatpush1.bf16.msra.mxu0 0
        %296 = vmatprep.subr.bf16.mxu0 0
        %297 = vmatpush1.bf16.msra.mxu0 0
        %298 = vmatprep.subr.bf16.mxu0 0
        %299 = vmatpush1.bf16.msra.mxu0 0
        %300 = vmatprep.subr.bf16.mxu0 0
        %301 = vmatpush1.bf16.msra.mxu0 0
        %302 = vmatprep.subr.bf16.mxu0 0
        %303 = vmatpush1.bf16.msra.mxu0 0
        %304 = vmatprep.subr.bf16.mxu0 0
        %305 = vmatpush1.bf16.msra.mxu0 0
        %306 = vmatprep.subr.bf16.mxu0 0
        %307 = vmatpush1.bf16.msra.mxu0 0
        %308 = vmatprep.subr.bf16.mxu0 0
        %309 = vmatpush1.bf16.msra.mxu0 0
        %310 = vmatprep.subr.bf16.mxu0 0
        %311 = vmatpush1.bf16.msra.mxu0 0
        %312 = vmatprep.subr.bf16.mxu0 0
        %313 = vmatpush1.bf16.msra.mxu0 0
        %314 = vmatprep.subr.bf16.mxu0 0
        %315 = vmatpush1.bf16.msra.mxu0 0
        %316 = vmatprep.subr.bf16.mxu0 0
        %317 = vmatpush1.bf16.msra.mxu0 0
        %318 = vmatprep.subr.bf16.mxu0 0
        %319 = vmatpush1.bf16.msra.mxu0 0
        %320 = vmatprep.subr.bf16.mxu0 0
        %321 = vmatpush1.bf16.msra.mxu0 0
        %322 = vmatprep.mubr.bf16.mxu0 0
        %323 = vmatmul.mubr.bf16.gmra.mrb[0].mxu0 %v281
        %v324 = vpop.f32.mrb[0].mxu0
        %v325 = vadd.f32 %v267, %v324
        %v326 = vpop.f32.mrb[0].mxu0
        %v327 = vpop.f32.mrb[0].mxu0
        %v328 = vadd.f32 %v267, %v327
        %v329 = vpop.f32.mrb[0].mxu0
        %330 = vmatprep.mubr.bf16.mxu0 0
        %331 = vmatmul.mubr.bf16.gmra.mrb[0].mxu0 %v284
        %v332 = vpop.f32.mrb[0].mxu0
        %v333 = vadd.f32 %v267, %v332
        %v334 = vpop.f32.mrb[0].mxu0
        %v335 = vpop.f32.mrb[0].mxu0
        %v336 = vadd.f32 %v267, %v335
        %v337 = vpop.f32.mrb[0].mxu0
        %338 = vdwg.mxu0
        %v339 = vmax.f32 %v325, 0.0
        %v340 = vmax.f32 %v328, 0.0
        %v341 = vmax.f32 %v333, 0.0
        %v342 = vmax.f32 %v336, 0.0
        %v343 = vpack.c.bf16 %v340, %v339
        %v344 = vpack.c.bf16 %v342, %v341
        %v345 = vld [vmem:[%s3] sm:$0xf]
        %v346 = vld [vmem:[%s3 + $0x4] sm:$0xf]
        %v347 = vld [vmem:[%s3 + $0x8] sm:$0xf]
        %v348 = vld [vmem:[%s3 + $0xc] sm:$0xf]
        %v349 = vld [vmem:[%s3 + $0x10] sm:$0xf]
        %v350 = vld [vmem:[%s3 + $0x14] sm:$0xf]
        %v351 = vld [vmem:[%s3 + $0x18] sm:$0xf]
        %v352 = vld [vmem:[%s3 + $0x1c] sm:$0xf]
        %v353 = vld [vmem:[%s3 + $0x20] sm:$0xf]
        %v354 = vld [vmem:[%s3 + $0x24] sm:$0xf]
        %v355 = vld [vmem:[%s3 + $0x28] sm:$0xf]
        %v356 = vld [vmem:[%s3 + $0x2c] sm:$0xf]
        %v357 = vld [vmem:[%s3 + $0x30] sm:$0xf]
        %v358 = vld [vmem:[%s3 + $0x34] sm:$0xf]
        %v359 = vld [vmem:[%s3 + $0x38] sm:$0xf]
        %v360 = vld [vmem:[%s3 + $0x3c] sm:$0xf]
        %v361 = vld [vmem:[%s4] sm:$0x1]
        %v363 = vlaneseq
        %v364 = vshrl.u32 %v363, 7
        %v365 = vsub.s32 0, %v364
        %v366 = vrot.slane %v361, %v365
        %v384 = vunpack.c.l.b16 %v345
        %v385 = vunpack.c.l.b16 %v346
        %v386 = vunpack.c.l.b16 %v347
        %v387 = vunpack.c.l.b16 %v348
        %v388 = vunpack.c.l.b16 %v349
        %v389 = vunpack.c.l.b16 %v350
        %v390 = vunpack.c.l.b16 %v351
        %v391 = vunpack.c.l.b16 %v352
        %v392 = vunpack.c.l.b16 %v353
        %v393 = vunpack.c.l.b16 %v354
        %v394 = vunpack.c.l.b16 %v355
        %v395 = vunpack.c.l.b16 %v356
        %v396 = vunpack.c.l.b16 %v357
        %v397 = vunpack.c.l.b16 %v358
        %v398 = vunpack.c.l.b16 %v359
        %v399 = vunpack.c.l.b16 %v360
        %v400 = vpack.c.b16 %v385, %v384
        %v401 = vpack.c.b16 %v387, %v386
        %v402 = vpack.c.b16 %v389, %v388
        %v403 = vpack.c.b16 %v391, %v390
        %v404 = vpack.c.b16 %v393, %v392
        %v405 = vpack.c.b16 %v395, %v394
        %v406 = vpack.c.b16 %v397, %v396
        %v407 = vpack.c.b16 %v399, %v398
        %416 = vmatprep.subr.bf16.mxu0 0
        %417 = vmatpush1.bf16.msra.mxu0 %v400
        %418 = vmatprep.subr.bf16.mxu0 0
        %419 = vmatpush1.bf16.msra.mxu0 %v401
        %420 = vmatprep.subr.bf16.mxu0 0
        %421 = vmatpush1.bf16.msra.mxu0 %v402
        %422 = vmatprep.subr.bf16.mxu0 0
        %423 = vmatpush1.bf16.msra.mxu0 %v403
        %424 = vmatprep.subr.bf16.mxu0 0
        %425 = vmatpush1.bf16.msra.mxu0 %v404
        %426 = vmatprep.subr.bf16.mxu0 0
        %427 = vmatpush1.bf16.msra.mxu0 %v405
        %428 = vmatprep.subr.bf16.mxu0 0
        %429 = vmatpush1.bf16.msra.mxu0 %v406
        %430 = vmatprep.subr.bf16.mxu0 0
        %431 = vmatpush1.bf16.msra.mxu0 %v407
        %432 = vmatprep.subr.bf16.mxu0 0
        %433 = vmatpush1.bf16.msra.mxu0 0
        %434 = vmatprep.subr.bf16.mxu0 0
        %435 = vmatpush1.bf16.msra.mxu0 0
        %436 = vmatprep.subr.bf16.mxu0 0
        %437 = vmatpush1.bf16.msra.mxu0 0
        %438 = vmatprep.subr.bf16.mxu0 0
        %439 = vmatpush1.bf16.msra.mxu0 0
        %440 = vmatprep.subr.bf16.mxu0 0
        %441 = vmatpush1.bf16.msra.mxu0 0
        %442 = vmatprep.subr.bf16.mxu0 0
        %443 = vmatpush1.bf16.msra.mxu0 0
        %444 = vmatprep.subr.bf16.mxu0 0
        %445 = vmatpush1.bf16.msra.mxu0 0
        %446 = vmatprep.subr.bf16.mxu0 0
        %447 = vmatpush1.bf16.msra.mxu0 0
        %448 = vmatprep.mubr.bf16.mxu0 0
        %449 = vmatmul.mubr.bf16.gmra.mrb[0].mxu0 %v343
        %v450 = vpop.f32.mrb[0].mxu0
        %v451 = vadd.f32 %v366, %v450
        %v452 = vpop.f32.mrb[0].mxu0
        %v453 = vpop.f32.mrb[0].mxu0
        %v454 = vadd.f32 %v366, %v453
        %v455 = vpop.f32.mrb[0].mxu0
        %456 = vmatprep.mubr.bf16.mxu0 0
        %457 = vmatmul.mubr.bf16.gmra.mrb[0].mxu0 %v344
        %v458 = vpop.f32.mrb[0].mxu0
        %v459 = vadd.f32 %v366, %v458
        %v460 = vpop.f32.mrb[0].mxu0
        %v461 = vpop.f32.mrb[0].mxu0
        %v462 = vadd.f32 %v366, %v461
        %v463 = vpop.f32.mrb[0].mxu0
        %464 = vdwg.mxu0
        %v465 = vmax.f32 %v451, 0.0
        %v466 = vmax.f32 %v454, 0.0
        %v467 = vmax.f32 %v459, 0.0
        %v468 = vmax.f32 %v462, 0.0
        %v469 = vmax.f32 %v465, %v466
        %v470 = vmax.f32 %v467, %v468
        %v471 = vmax.f32 %v469, %v470
        %v472 = vrot.slane %v471, 4
        %v473 = vmax.f32 %v471, %v472
        %v474 = vrot.slane %v473, 2
        %v475 = vmax.f32 %v473, %v474
        %v476 = vrot.slane %v475, 1
        %v477 = vmax.f32 %v475, %v476
        %v478 = vld [vmem:[%s240] sm:$0xff]
        %v479 = vmax.f32 %v478, %v477
        %480 = vst [vmem:[%s240] sm:$0xff] %v479
        %s481 = sand.u32 %s151, 1
        %s482 = scalar_lea.sflag [#allocation3], %s481
        %s483 = sand.u32 %s151, 1
        %s484 = smul.addr %s483, 8
        %s485 = scalar_lea.vmem [#allocation2], %s484
        // Predicated region
        $region45: #{tpu_custom_call.1} parent=39 // pred_check
          %p486 = pneg %p161
        $region46: #{tpu_custom_call.1} parent=39 // pred_check_branch
          %488 = sbr.rel (%p486) target = $region48
        $region47: #{tpu_custom_call.1} parent=39 // pred_region
          %s490 = ssub.s32 128, 128
          %491 = vsyncadd %s482, %s490
          %s492 = smul.addr %s23, 128
          %s493 = scalar_lea.hbm %s5, %s492
          %s495 = sshll.u32 %s485, 4
          %s496 = int_to_ptr.vmem [resolvable:$true] %s495
          %498 = dma.vmem_to_hbm [thread:$0]  %s496, 128, %s493, %s482
        $region48: #{tpu_custom_call.1} parent=39 // pred_fallthru
          _
      $region40: #{tpu_custom_call.1} parent=5 // pred_fallthru
        _
      %p499 = scmp.le.s32.totalorder 2, %s14
      // Predicated region
      $region49: #{tpu_custom_call.1} parent=5 // pred_check
        %p500 = pneg %p499
      $region50: #{tpu_custom_call.1} parent=5 // pred_check_branch
        %502 = sbr.rel (%p500) target = $region52
      $region51: #{tpu_custom_call.1} parent=5 // pred_region
        %s503 = ssub.s32 %s14, 2
        // Predicated region
        $region53: #{tpu_custom_call.1} parent=51 // pred_check
          %p504 = pneg %p167
        $region54: #{tpu_custom_call.1} parent=51 // pred_check_branch
          %506 = sbr.rel (%p504) target = $region56
        $region55: #{tpu_custom_call.1} parent=51 // pred_region
          %s507 = sand.u32 %s152, 1
          %s508 = scalar_lea.sflag [#allocation3], %s507
          %s509 = sand.u32 %s152, 1
          %s510 = smul.addr %s509, 8
          %s511 = scalar_lea.vmem [#allocation2], %s510
          %512 = dma.done %s508, 128
        $region56: #{tpu_custom_call.1} parent=51 // pred_fallthru
          _
      $region52: #{tpu_custom_call.1} parent=5 // pred_fallthru
        _
    $region6: #{tpu_custom_call.1} parent=1 // loop_footer
      %s18 = sadd.s32 1, %s14
    $region7: #{tpu_custom_call.1} parent=1 // loop_footer_branch
      %13 = sbr.rel target = $region3
    $region8: #{tpu_custom_call.1} parent=1 // loop_exit
      _
    %513 = vsyncpa [#allocation3], 1
    %s514 = scalar_lea.sflag [#allocation3], 1
    %515 = vsyncpa %s514, 1

</llo_original>
